<compile_context>
chip_gen: v5e
topology: v5e:2x2
jax: 0.10.0
libtpu: 0.0.40
codegen_flags: <defaults>
</compile_context>

<pallas_src>
import functools

import jax
import jax.numpy as jnp
from jax import lax
from jax.experimental import pallas as pl
from jax.experimental.pallas import tpu as pltpu

IGNORE_INDEX = 255


def _img_ce2d_kernel(x_ref, t_ref, nll_out_ref, cnt_out_ref, acc_nll, acc_cnt,
                     *, ignore_index, num_pixels, steps_per_split,
                     needs_tail_mask, exp_dtype):
    """Per-(image, split, pixel-tile) accumulation.

    x_ref:       (1, C, TP)  logits tile (pixels on lanes, classes on sublanes)
    t_ref:       (1, 1, TP)  int targets tile
    nll_out_ref: (1, 1, C, 1) per-(image,split) per-class sum of -log p[target]
    cnt_out_ref: (1, 1, C, 1) per-(image,split) per-class valid-pixel count
    acc_nll:     (C, TP)     f32 VMEM lane accumulator
    acc_cnt:     (C, TP)     f32 VMEM lane accumulator
    """
    s = pl.program_id(1)
    j = pl.program_id(2)

    @pl.when(j == 0)
    def _():
        acc_nll[...] = jnp.zeros_like(acc_nll)
        acc_cnt[...] = jnp.zeros_like(acc_cnt)

    x = x_ref[0].astype(jnp.float32)       # (C, TP), f32 compute
    t = t_ref[0].astype(jnp.int32)         # (1, TP)
    C, TP = x.shape

    # column-wise (per-pixel) log-softmax over the class (sublane) axis
    xm = x - jnp.max(x, axis=0, keepdims=True)                     # (C, TP)
    p = jnp.exp(xm.astype(exp_dtype)).astype(jnp.float32)          # bf16 EUP on v6e/v7x
    lse = jnp.log(jnp.sum(p, axis=0, keepdims=True))               # (1, TP)

    # one-hot of the target class (no dynamic gather on TPU)
    cls = lax.broadcasted_iota(jnp.int32, (C, TP), 0)               # (C, TP)
    onehot = cls == t                                               # (C, TP)

    # mask: pixels that are not ignore_index (and in-bounds when ragged)
    if needs_tail_mask:
        base = (s * steps_per_split + j) * TP
        col = base + lax.broadcasted_iota(jnp.int32, (1, TP), 1)
        valid = (t != ignore_index) & (col < num_pixels)            # (1, TP)
    else:
        valid = t != ignore_index
    sel = onehot & valid                                            # (C, TP)

    # where sel is true, x IS the target logit, so -log p[target] = lse - xm
    # (select, NOT multiply-by-mask: padded garbage may hold inf/NaN)
    acc_nll[...] += jnp.where(sel, lse - xm, 0.0)
    acc_cnt[...] += sel.astype(jnp.float32)

    @pl.when(j == pl.num_programs(2) - 1)
    def _():
        nll_out_ref[...] = jnp.sum(acc_nll[...], axis=1, keepdims=True)[None, None]
        cnt_out_ref[...] = jnp.sum(acc_cnt[...], axis=1, keepdims=True)[None, None]


def _tpu_config():
    """(is_v7x, working_vmem_budget, vmem_limit_bytes, exp_in_bf16_default)."""
    kind = ""
    try:
        kind = jax.devices()[0].device_kind.lower()
    except Exception:
        pass
    vmem_cap = 128 * 1024 * 1024
    try:
        vmem_cap = int(pltpu.get_tpu_info().vmem_capacity_bytes)
    except Exception:
        pass
    is_v7x = ("v7" in kind) or ("tpu7" in kind) or (vmem_cap <= 64 * 1024 * 1024)
    is_v5 = ("v5 lite" in kind) or ("v5e" in kind) or ("v5lite" in kind) or ("v5" in kind)
    # Gen-aware working budget for the tile chooser and scoped VMEM limit.
    working = (10 if is_v7x else 20) * 1024 * 1024
    working = min(working, max(2 * 1024 * 1024, vmem_cap // 5))
    vmem_limit = min((48 if is_v7x else 64) * 1024 * 1024, vmem_cap)
    exp_bf16 = not is_v5           # v5e EUP has no bf16 path; v6e/v7x do
    return is_v7x, working, vmem_limit, exp_bf16


def _choose_tile_pixels(c, hw, tile_pixels, working_budget, in_bytes, splits):
    """Lane tile: multiple of 128 (or full hw), capped by an honest VMEM model."""
    # Per-pixel resident f32-equivalent bytes per step:
    #   2 double-buffered (C,TP) logit blocks at the streaming dtype
    # + 2 (C,TP) f32 accumulators
    # + ~4 (C,TP) f32 elementwise temporaries Mosaic materializes
    # + targets / mask scraps.
    per_px = c * (2 * in_bytes + 6 * 4) + 16
    cap = max(128, (working_budget // per_px) // 128 * 128)
    tp = min(int(tile_pixels), cap)
    if splits > 1:
        # give each TensorCore at least one tile of work
        half = -(-hw // splits)
        tp = min(tp, max(128, -(-half // 128) * 128))
    if hw <= tp:
        return hw                       # one full-width block, no padding
    return max(128, (tp // 128) * 128)


def image_based_cross_entropy_loss_2d(inputs, targets, *,
                                      ignore_index=IGNORE_INDEX,
                                      size_average=True,
                                      norm=False,
                                      upper_bound=1.0,
                                      batch_weights=False,
                                      tile_pixels=8192,
                                      logits_dtype=jnp.bfloat16,
                                      exp_in_bf16=None):
    """inputs: (N, C, H, W) float logits; targets: (N, H, W) int class ids."""
    n, c, h, w = inputs.shape
    hw = h * w

    x = inputs.reshape(n, c, hw)                  # free reshape, no transpose
    if logits_dtype is not None and jnp.issubdtype(x.dtype, jnp.floating) \
            and jnp.dtype(x.dtype).itemsize > jnp.dtype(logits_dtype).itemsize:
        x = x.astype(logits_dtype)                # stream bf16, compute f32
    t = targets.reshape(n, 1, hw)
    if not jnp.issubdtype(t.dtype, jnp.integer):
        t = t.astype(jnp.int32)
    # NOTE: int8/uint8 target streaming (v5e small-C micro-opt) intentionally
    # not applied; targets stay at their integer dtype.

    is_v7x, working_budget, vmem_limit, exp_bf16_default = _tpu_config()
    use_bf16_exp = exp_bf16_default if exp_in_bf16 is None else bool(exp_in_bf16)
    in_bytes = jnp.dtype(x.dtype).itemsize

    # On v7x, split the pixel axis across the two TensorCores when the image
    # ("parallel") axis alone cannot fill both cores.
    splits = 2 if (is_v7x and (n % 2 == 1)) else 1

    tp = _choose_tile_pixels(c, hw, tile_pixels, working_budget, in_bytes, splits)
    total_steps = pl.cdiv(hw, tp)
    sps = pl.cdiv(total_steps, splits)            # pixel-tile steps per split
    needs_tail_mask = (splits * sps * tp != hw)
    needs_clamp = (splits * sps != total_steps)

    if needs_clamp:
        def px_block(i, s, j):
            return (i, 0, jnp.minimum(s * sps + j, total_steps - 1))
    else:
        def px_block(i, s, j):
            return (i, 0, s * sps + j)

    kernel = functools.partial(
        _img_ce2d_kernel,
        ignore_index=ignore_index,
        num_pixels=hw,
        steps_per_split=sps,
        needs_tail_mask=needs_tail_mask,
        exp_dtype=jnp.bfloat16 if use_bf16_exp else jnp.float32)

    per_class_nll, per_class_cnt = pl.pallas_call(
        kernel,
        out_shape=(
            jax.ShapeDtypeStruct((n, splits, c, 1), jnp.float32),
            jax.ShapeDtypeStruct((n, splits, c, 1), jnp.float32),
        ),
        grid_spec=pltpu.PrefetchScalarGridSpec(
            num_scalar_prefetch=0,
            grid=(n, splits, sps),
            in_specs=[
                pl.BlockSpec((1, c, tp), px_block),
                pl.BlockSpec((1, 1, tp), px_block),
            ],
            out_specs=[
                pl.BlockSpec((1, 1, c, 1), lambda i, s, j: (i, s, 0, 0)),
                pl.BlockSpec((1, 1, c, 1), lambda i, s, j: (i, s, 0, 0)),
            ],
            scratch_shapes=[
                pltpu.VMEM((c, tp), jnp.float32),
                pltpu.VMEM((c, tp), jnp.float32),
            ],
        ),
        compiler_params=pltpu.CompilerParams(
            dimension_semantics=("parallel", "parallel", "arbitrary"),
            vmem_limit_bytes=vmem_limit,
        ),
    )(x, t)

    nll_c = jnp.sum(per_class_nll[..., 0], axis=1)   # (N, C) sum -log p[target]
    cnt_c = jnp.sum(per_class_cnt[..., 0], axis=1)   # (N, C) valid-pixel count

    # histogram-based class weights (per image, or per batch if batch_weights).
    # Counts exclude ignore_index / out-of-range ids, matching
    # np.histogram(range=(0, C)) because ignore_index=255 >= C.
    if batch_weights:
        hist_cnt = jnp.broadcast_to(jnp.sum(cnt_c, axis=0, keepdims=True),
                                    cnt_c.shape)
    else:
        hist_cnt = cnt_c
    total = jnp.sum(hist_cnt, axis=1, keepdims=True)
    hist = hist_cnt / jnp.maximum(total, 1.0)
    if norm:
        wts = jnp.where(hist_cnt > 0,
                        upper_bound / jnp.maximum(hist, 1e-30) + 1.0, 1.0)
    else:
        wts = jnp.where(hist_cnt > 0, upper_bound * (1.0 - hist) + 1.0, 1.0)

    # weighted NLL: sum_c w_c * S_c  /  sum_c w_c * cnt_c   (per image)
    num = jnp.sum(wts * nll_c, axis=1)     # (N,)
    den = jnp.sum(wts * cnt_c, axis=1)     # (N,)
    if size_average:
        per_image = jnp.where(den > 0, num / den, 0.0)
    else:
        per_image = num
    return jnp.sum(per_image)              # PyTorch module sums over images


def _reference(inputs, targets, ignore_index=IGNORE_INDEX, upper_bound=1.0):
    """Pure-JAX reference matching ImageBasedCrossEntropyLoss2d
    (norm=False, size_average=True, per-image weights)."""
    n, c, h, w = inputs.shape
    logp = jax.nn.log_softmax(inputs.astype(jnp.float32), axis=1)
    total = jnp.float32(0.0)
    for i in range(n):
        t = targets[i].reshape(-1)
        in_range = (t >= 0) & (t < c)                    # histogram range
        ones = jnp.where(in_range, 1.0, 0.0)
        counts = jnp.zeros((c,), jnp.float32).at[jnp.where(in_range, t, 0)].add(ones)
        hist = counts / jnp.maximum(counts.sum(), 1.0)
        wts = jnp.where(counts != 0, upper_bound * (1.0 - hist) + 1.0, 1.0)

        lp = logp[i].reshape(c, -1)                      # (C, HW)
        nll_valid = t != ignore_index
        t_safe = jnp.where(nll_valid, t, 0)
        picked = jnp.take_along_axis(lp, t_safe[None, :], axis=0)[0]
        w_t = wts[t_safe]
        num = jnp.sum(jnp.where(nll_valid, -picked * w_t, 0.0))
        den = jnp.sum(jnp.where(nll_valid, w_t, 0.0))
        total = total + num / den
    return total


if __name__ == "__main__":
    key = jax.random.PRNGKey(0)
    k1, k2, k3, k4, k5, k6 = jax.random.split(key, 6)

    # --- case 1: exact path (f32 stream, f32 exp) vs reference, tight tol ----
    N, C, H, W = 2, 4, 16, 16
    inputs = jax.random.normal(k1, (N, C, H, W), dtype=jnp.float32)
    targets = jax.random.randint(k2, (N, H, W), 0, C, dtype=jnp.int32)
    ignore_mask = jax.random.uniform(k3, (N, H, W)) < 0.1
    targets = jnp.where(ignore_mask, IGNORE_INDEX, targets)

    loss_exact = image_based_cross_entropy_loss_2d(
        inputs, targets, logits_dtype=None, exp_in_bf16=False)
    loss_exact = jax.block_until_ready(loss_exact)
    ref_exact = _reference(inputs, targets)
    assert jnp.allclose(loss_exact, ref_exact, rtol=1e-4, atol=1e-4), (
        loss_exact, ref_exact)

    # --- case 2: fast path (bf16 stream, chip-auto bf16 exp), loose tol ------
    loss_fast = image_based_cross_entropy_loss_2d(inputs, targets)
    loss_fast = jax.block_until_ready(loss_fast)
    ref_fast = _reference(inputs.astype(jnp.bfloat16).astype(jnp.float32), targets)
    assert jnp.allclose(loss_fast, ref_fast, rtol=2e-2, atol=2e-2), (
        loss_fast, ref_fast)

    # --- case 3: multi-tile + ragged last tile (exercise tail masking) -------
    N2, C2, H2, W2 = 2, 4, 18, 18          # hw=324, tile=128 -> 3 tiles, ragged
    inputs2 = jax.random.normal(k4, (N2, C2, H2, W2), dtype=jnp.float32)
    targets2 = jax.random.randint(k5, (N2, H2, W2), 0, C2, dtype=jnp.int32)
    ignore_mask2 = jax.random.uniform(k6, (N2, H2, W2)) < 0.1
    targets2 = jnp.where(ignore_mask2, IGNORE_INDEX, targets2)

    loss_tiled = image_based_cross_entropy_loss_2d(
        inputs2, targets2, logits_dtype=None, exp_in_bf16=False, tile_pixels=128)
    loss_tiled = jax.block_until_ready(loss_tiled)
    ref_tiled = _reference(inputs2, targets2)
    assert jnp.allclose(loss_tiled, ref_tiled, rtol=1e-4, atol=1e-4), (
        loss_tiled, ref_tiled)

    print("KERNEL_OK")
</pallas_src>

<mosaic_0001>
module attributes {stable_mosaic.version = 11 : i64} {
  func.func @_img_ce2d_kernel(%arg0: i32, %arg1: i32, %arg2: i32, %arg3: memref<1x4x256xf32, #tpu.memory_space<vmem>>, %arg4: memref<1x1x256xi32, #tpu.memory_space<vmem>>, %arg5: memref<1x1x4x1xf32, #tpu.memory_space<vmem>>, %arg6: memref<1x1x4x1xf32, #tpu.memory_space<vmem>>, %arg7: memref<4x256xf32, #tpu.memory_space<vmem>>, %arg8: memref<4x256xf32, #tpu.memory_space<vmem>>) attributes {dimension_semantics = [#tpu.dimension_semantics<parallel>, #tpu.dimension_semantics<parallel>, #tpu.dimension_semantics<arbitrary>], iteration_bounds = array<i64: 2, 1, 1>, scalar_prefetch = 0 : i64, scratch_operands = 2 : i64, tpu.core_type = #tpu.core_type<tc>, window_params = [{transform_indices = @transform_0, window_bounds = array<i64: 1, 4, 256>}, {transform_indices = @transform_1, window_bounds = array<i64: 1, 1, 256>}, {transform_indices = @transform_2, window_bounds = array<i64: 1, 1, 4, 1>}, {transform_indices = @transform_3, window_bounds = array<i64: 1, 1, 4, 1>}]} {
    %c0_i32 = arith.constant 0 : i32
    %0 = arith.cmpi eq, %arg2, %c0_i32 : i32
    %1 = arith.extui %0 : i1 to i32
    %c0_i32_0 = arith.constant 0 : i32
    %2 = arith.cmpi ne, %1, %c0_i32_0 : i32
    scf.if %2 {
      %cst_18 = arith.constant 0.000000e+00 : f32
      %37 = vector.broadcast %cst_18 : f32 to vector<4x256xf32>
      %c0_19 = arith.constant 0 : index
      %c0_20 = arith.constant 0 : index
      %38 = vector.load %arg7[%c0_19, %c0_20] : memref<4x256xf32, #tpu.memory_space<vmem>>, vector<4x256xf32>
      tpu.vector_store %arg7[%c0_19, %c0_20], %37 {strides = array<i32>} : memref<4x256xf32, #tpu.memory_space<vmem>>, vector<4x256xf32>,
      %cst_21 = arith.constant 0.000000e+00 : f32
      %39 = vector.broadcast %cst_21 : f32 to vector<4x256xf32>
      %c0_22 = arith.constant 0 : index
      %c0_23 = arith.constant 0 : index
      %40 = vector.load %arg8[%c0_22, %c0_23] : memref<4x256xf32, #tpu.memory_space<vmem>>, vector<4x256xf32>
      tpu.vector_store %arg8[%c0_22, %c0_23], %39 {strides = array<i32>} : memref<4x256xf32, #tpu.memory_space<vmem>>, vector<4x256xf32>,
    } else {
    }
    %c0 = arith.constant 0 : index
    %c0_1 = arith.constant 0 : index
    %c0_2 = arith.constant 0 : index
    %3 = vector.load %arg3[%c0, %c0_1, %c0_2] : memref<1x4x256xf32, #tpu.memory_space<vmem>>, vector<1x4x256xf32>
    %4 = vector.shape_cast %3 : vector<1x4x256xf32> to vector<4x256xf32>
    %c0_3 = arith.constant 0 : index
    %c0_4 = arith.constant 0 : index
    %c0_5 = arith.constant 0 : index
    %5 = vector.load %arg4[%c0_3, %c0_4, %c0_5] : memref<1x1x256xi32, #tpu.memory_space<vmem>>, vector<1x1x256xi32>
    %6 = vector.shape_cast %5 : vector<1x1x256xi32> to vector<1x256xi32>
    %cst = arith.constant dense<0xFF800000> : vector<256xf32>
    %7 = vector.multi_reduction <maximumf>, %4, %cst [0] : vector<4x256xf32> to vector<256xf32>
    %8 = vector.shape_cast %7 : vector<256xf32> to vector<1x256xf32>
    %9 = vector.broadcast %8 : vector<1x256xf32> to vector<4x256xf32>
    %10 = arith.subf %4, %9 : vector<4x256xf32>
    %11 = math.exp %10 : vector<4x256xf32>
    %cst_6 = arith.constant dense<0.000000e+00> : vector<256xf32>
    %12 = vector.multi_reduction <add>, %11, %cst_6 [0] : vector<4x256xf32> to vector<256xf32>
    %13 = vector.shape_cast %12 : vector<256xf32> to vector<1x256xf32>
    %14 = math.log %13 : vector<1x256xf32>
    %15 = tpu.iota {dimensions = array<i32: 0>} : vector<4x256xi32>
    %16 = vector.broadcast %6 : vector<1x256xi32> to vector<4x256xi32>
    %17 = arith.cmpi eq, %15, %16 : vector<4x256xi32>
    %c255_i32 = arith.constant 255 : i32
    %18 = vector.broadcast %c255_i32 : i32 to vector<1x256xi32>
    %19 = arith.cmpi ne, %6, %18 : vector<1x256xi32>
    %20 = vector.broadcast %19 : vector<1x256xi1> to vector<4x256xi1>
    %21 = arith.andi %17, %20 : vector<4x256xi1>
    %c0_7 = arith.constant 0 : index
    %c0_8 = arith.constant 0 : index
    %22 = vector.load %arg7[%c0_7, %c0_8] : memref<4x256xf32, #tpu.memory_space<vmem>>, vector<4x256xf32>
    %23 = vector.broadcast %14 : vector<1x256xf32> to vector<4x256xf32>
    %24 = arith.subf %23, %10 : vector<4x256xf32>
    %cst_9 = arith.constant 0.000000e+00 : f32
    %25 = vector.broadcast %cst_9 : f32 to vector<4x256xf32>
    %26 = arith.select %21, %24, %25 : vector<4x256xi1>, vector<4x256xf32>
    %27 = arith.addf %22, %26 : vector<4x256xf32>
    %c0_10 = arith.constant 0 : index
    %c0_11 = arith.constant 0 : index
    %28 = vector.load %arg7[%c0_10, %c0_11] : memref<4x256xf32, #tpu.memory_space<vmem>>, vector<4x256xf32>
    tpu.vector_store %arg7[%c0_10, %c0_11], %27 {strides = array<i32>} : memref<4x256xf32, #tpu.memory_space<vmem>>, vector<4x256xf32>,
    %c0_12 = arith.constant 0 : index
    %c0_13 = arith.constant 0 : index
    %29 = vector.load %arg8[%c0_12, %c0_13] : memref<4x256xf32, #tpu.memory_space<vmem>>, vector<4x256xf32>
    %30 = arith.extui %21 : vector<4x256xi1> to vector<4x256xi32>
    %31 = arith.sitofp %30 : vector<4x256xi32> to vector<4x256xf32>
    %32 = arith.addf %29, %31 : vector<4x256xf32>
    %c0_14 = arith.constant 0 : index
    %c0_15 = arith.constant 0 : index
    %33 = vector.load %arg8[%c0_14, %c0_15] : memref<4x256xf32, #tpu.memory_space<vmem>>, vector<4x256xf32>
    tpu.vector_store %arg8[%c0_14, %c0_15], %32 {strides = array<i32>} : memref<4x256xf32, #tpu.memory_space<vmem>>, vector<4x256xf32>,
    %c0_i32_16 = arith.constant 0 : i32
    %34 = arith.cmpi eq, %arg2, %c0_i32_16 : i32
    %35 = arith.extui %34 : i1 to i32
    %c0_i32_17 = arith.constant 0 : i32
    %36 = arith.cmpi ne, %35, %c0_i32_17 : i32
    scf.if %36 {
      %c0_18 = arith.constant 0 : index
      %c0_19 = arith.constant 0 : index
      %37 = vector.load %arg7[%c0_18, %c0_19] : memref<4x256xf32, #tpu.memory_space<vmem>>, vector<4x256xf32>
      %cst_20 = arith.constant dense<0.000000e+00> : vector<4xf32>
      %38 = vector.multi_reduction <add>, %37, %cst_20 [1] : vector<4x256xf32> to vector<4xf32>
      %39 = vector.shape_cast %38 : vector<4xf32> to vector<4x1xf32>
      %40 = vector.shape_cast %39 : vector<4x1xf32> to vector<1x1x4x1xf32>
      %c0_21 = arith.constant 0 : index
      %c0_22 = arith.constant 0 : index
      %c0_23 = arith.constant 0 : index
      %c0_24 = arith.constant 0 : index
      %41 = vector.load %arg5[%c0_21, %c0_22, %c0_23, %c0_24] : memref<1x1x4x1xf32, #tpu.memory_space<vmem>>, vector<1x1x4x1xf32>
      tpu.vector_store %arg5[%c0_21, %c0_22, %c0_23, %c0_24], %40 {strides = array<i32>} : memref<1x1x4x1xf32, #tpu.memory_space<vmem>>, vector<1x1x4x1xf32>,
      %c0_25 = arith.constant 0 : index
      %c0_26 = arith.constant 0 : index
      %42 = vector.load %arg8[%c0_25, %c0_26] : memref<4x256xf32, #tpu.memory_space<vmem>>, vector<4x256xf32>
      %cst_27 = arith.constant dense<0.000000e+00> : vector<4xf32>
      %43 = vector.multi_reduction <add>, %42, %cst_27 [1] : vector<4x256xf32> to vector<4xf32>
      %44 = vector.shape_cast %43 : vector<4xf32> to vector<4x1xf32>
      %45 = vector.shape_cast %44 : vector<4x1xf32> to vector<1x1x4x1xf32>
      %c0_28 = arith.constant 0 : index
      %c0_29 = arith.constant 0 : index
      %c0_30 = arith.constant 0 : index
      %c0_31 = arith.constant 0 : index
      %46 = vector.load %arg6[%c0_28, %c0_29, %c0_30, %c0_31] : memref<1x1x4x1xf32, #tpu.memory_space<vmem>>, vector<1x1x4x1xf32>
      tpu.vector_store %arg6[%c0_28, %c0_29, %c0_30, %c0_31], %45 {strides = array<i32>} : memref<1x1x4x1xf32, #tpu.memory_space<vmem>>, vector<1x1x4x1xf32>,
    } else {
    }
    return
  }
  func.func @transform_0(%arg0: i32, %arg1: i32, %arg2: i32) -> (i32, i32, i32) {
    %c1_i32 = arith.constant 1 : i32
    %0 = arith.muli %arg1, %c1_i32 : i32
    %1 = arith.addi %0, %arg2 : i32
    %c0_i32 = arith.constant 0 : i32
    %c0_i32_0 = arith.constant 0 : i32
    return %arg0, %c0_i32, %1 : i32, i32, i32
  }
  func.func @transform_1(%arg0: i32, %arg1: i32, %arg2: i32) -> (i32, i32, i32) {
    %c1_i32 = arith.constant 1 : i32
    %0 = arith.muli %arg1, %c1_i32 : i32
    %1 = arith.addi %0, %arg2 : i32
    %c0_i32 = arith.constant 0 : i32
    %c0_i32_0 = arith.constant 0 : i32
    return %arg0, %c0_i32, %1 : i32, i32, i32
  }
  func.func @transform_2(%arg0: i32, %arg1: i32, %arg2: i32) -> (i32, i32, i32, i32) {
    %c0_i32 = arith.constant 0 : i32
    %c0_i32_0 = arith.constant 0 : i32
    %c0_i32_1 = arith.constant 0 : i32
    return %arg0, %arg1, %c0_i32, %c0_i32_0 : i32, i32, i32, i32
  }
  func.func @transform_3(%arg0: i32, %arg1: i32, %arg2: i32) -> (i32, i32, i32, i32) {
    %c0_i32 = arith.constant 0 : i32
    %c0_i32_0 = arith.constant 0 : i32
    %c0_i32_1 = arith.constant 0 : i32
    return %arg0, %arg1, %c0_i32, %c0_i32_0 : i32, i32, i32, i32
  }
}

</mosaic_0001>

<llo_original>
// kernel: tpu_custom_call.1
$region0: #{tpu_custom_call.1}
  #allocation0 [shape = 'u32[]', space=smem, size = 0x4, offset = 0x4, fixed_abs, tag = 'smem constant byte address 0x4 - core index']
  #allocation1 [shape = 'u32[72,128]{1,0:T(1,128)}', space=vmem, size = 0x9000, scoped, tag = 'internal scratch']
  #allocation2 [shape = 'f32[4,256]{1,0:T(4,128)}', space=vmem, size = 0x1000, scoped, tag = 'scratch operand']
  #allocation3 [shape = 'f32[4,256]{1,0:T(4,128)}', space=vmem, size = 0x1000, scoped, tag = 'scratch operand']
  %s0 = inlined_call_operand.hbm [shape: f32[2,4,256], index: 0, kind: input, shape index: {}]
  %s1 = inlined_call_operand.hbm [shape: s32[2,1,256], index: 1, kind: input, shape index: {}]
  %s2 = inlined_call_operand.vmem [shape: f32[2,1,4,1], index: 2, kind: output, shape index: {0}]
  %s3 = inlined_call_operand.vmem [shape: f32[2,1,4,1], index: 3, kind: output, shape index: {1}]
  %4 = xla_tuple %s2, %s3
  %s5 = sld [smem:[#allocation0]]
  $region65: #{tpu_custom_call.1} parent=0
    _
  %s7 = ssub.s32 1, %s5
  %s8 = scalar_select 0, %s7, %s5
  $region1: #{tpu_custom_call.1} parent=0
    #allocation4 [shape = 'u8[8192]{0}', space=vmem, size = 0x2000, scoped, tag = 'input window, operand 0']
    #allocation5 [shape = 's32[2]{0}', space=sflag, size = 0x8, scoped, tag = 'scoped memory for tpu_custom_call.1']
    #allocation6 [shape = 'u8[2048]{0}', space=vmem, size = 0x800, scoped, tag = 'input window, operand 1']
    #allocation7 [shape = 's32[2]{0}', space=sflag, size = 0x8, scoped, tag = 'scoped memory for tpu_custom_call.1']
    %9 = vsyncpa [#allocation5], 0
    %s10 = scalar_lea.sflag [#allocation5], 1
    %11 = vsyncpa %s10, 0
    %12 = vsyncpa [#allocation7], 0
    %s13 = scalar_lea.sflag [#allocation7], 1
    %14 = vsyncpa %s13, 0
    loop: start=0, step=1, limit=4
    $region2: #{tpu_custom_call.1} parent=1 // loop_pre_header
      _
    $region3: #{tpu_custom_call.1} parent=1 // loop_header
      %s16 = sphi 0, %s20
      %p17 = scmp.ge.s32.totalorder %s16, 4
      %s23 = sphi 0, %s42
      %s24 = sphi 0, %s38
      %s25 = sphi 0, %s34
      %s26 = sphi 0, %s23
      %s27 = sphi 0, %s24
      %s28 = sphi 0, %s25
      %s29 = sphi 0, %s26
      %s30 = sphi 0, %s27
      %s31 = sphi 0, %s28
      %s49 = sphi 0, %s51
      %s52 = sphi 0, %s49
      %s53 = sphi 0, %s52
      %s69 = sphi 0, %s53
      %s79 = sphi 0, %s81
      %s82 = sphi 0, %s79
      %s83 = sphi 0, %s82
      %s99 = sphi 0, %s83
      %s107 = sphi 0, %s109
      %s110 = sphi 0, %s107
      %s111 = sphi 0, %s110
      %s127 = sphi 0, %s111
      %s135 = sphi 0, %s137
      %s138 = sphi 0, %s135
      %s139 = sphi 0, %s138
      %s155 = sphi 0, %s139
    $region4: #{tpu_custom_call.1} parent=1 // loop_header_branch
      %19 = sbr.rel (%p17) target = $region8
    $region5: #{tpu_custom_call.1} parent=1 // loop_body
      %s21 = ssub.s32 %s16, 1
      %s22 = ssub.s32 %s16, 2
      %s32 = sadd.s32 1, %s25
      %p33 = scmp.ge.s32.totalorder %s32, 1
      %s34 = scalar_select %p33, 0, %s32
      %s35 = sadd.s32 1, %s24
      %s36 = scalar_select %p33, %s35, %s24
      %p37 = scmp.ge.s32.totalorder %s36, 1
      %s38 = scalar_select %p37, 0, %s36
      %s39 = sadd.s32 1, %s23
      %s40 = scalar_select %p37, %s39, %s23
      %p41 = scmp.ge.s32.totalorder %s40, 2
      %s42 = scalar_select %p41, 0, %s40
      %s43 = sadd.s32 %s24, %s25
      %s44 = sadd.s32 %s38, %s34
      %s45 = ssub.s32 %s23, %s42
      %s46 = ssub.s32 %s43, %s44
      %s47 = sor.u32 %s45, %s46
      %p48 = scmp.eq.s32.totalorder %s47, 0
      %s50 = sadd.s32 %s49, 1
      %s51 = scalar_select %p48, %s49, %s50
      %p54 = pneg %p48
      %p55 = scmp.eq.s32.totalorder %s16, 1
      %p56 = por %p54, %p55
      %p57 = scmp.ne.s32.totalorder %s49, %s52
      %p58 = scmp.eq.s32.totalorder %s16, 0
      %p59 = por %p57, %p58
      %p60 = scmp.ne.s32.totalorder %s49, %s52
      %p61 = scmp.eq.s32.totalorder %s21, 1
      %p62 = por %p60, %p61
      %p63 = scmp.ne.s32.totalorder %s52, %s53
      %p64 = scmp.eq.s32.totalorder %s21, 0
      %p65 = por %p63, %p64
      %p66 = scmp.ne.s32.totalorder %s52, %s53
      %p67 = scmp.eq.s32.totalorder %s22, 1
      %p68 = por %p66, %p67
      %p70 = scmp.ne.s32.totalorder %s53, %s69
      %p71 = scmp.eq.s32.totalorder %s22, 0
      %p72 = por %p70, %p71
      %s73 = sadd.s32 %s24, %s25
      %s74 = sadd.s32 %s38, %s34
      %s75 = ssub.s32 %s23, %s42
      %s76 = ssub.s32 %s73, %s74
      %s77 = sor.u32 %s75, %s76
      %p78 = scmp.eq.s32.totalorder %s77, 0
      %s80 = sadd.s32 %s79, 1
      %s81 = scalar_select %p78, %s79, %s80
      %p84 = pneg %p78
      %p85 = scmp.eq.s32.totalorder %s16, 1
      %p86 = por %p84, %p85
      %p87 = scmp.ne.s32.totalorder %s79, %s82
      %p88 = scmp.eq.s32.totalorder %s16, 0
      %p89 = por %p87, %p88
      %p90 = scmp.ne.s32.totalorder %s79, %s82
      %p91 = scmp.eq.s32.totalorder %s21, 1
      %p92 = por %p90, %p91
      %p93 = scmp.ne.s32.totalorder %s82, %s83
      %p94 = scmp.eq.s32.totalorder %s21, 0
      %p95 = por %p93, %p94
      %p96 = scmp.ne.s32.totalorder %s82, %s83
      %p97 = scmp.eq.s32.totalorder %s22, 1
      %p98 = por %p96, %p97
      %p100 = scmp.ne.s32.totalorder %s83, %s99
      %p101 = scmp.eq.s32.totalorder %s22, 0
      %p102 = por %p100, %p101
      %s103 = ssub.s32 %s23, %s42
      %s104 = ssub.s32 %s24, %s38
      %s105 = sor.u32 %s103, %s104
      %p106 = scmp.eq.s32.totalorder %s105, 0
      %s108 = sadd.s32 %s107, 1
      %s109 = scalar_select %p106, %s107, %s108
      %p112 = pneg %p106
      %p113 = scmp.eq.s32.totalorder %s16, 1
      %p114 = por %p112, %p113
      %p115 = scmp.ne.s32.totalorder %s107, %s110
      %p116 = scmp.eq.s32.totalorder %s16, 0
      %p117 = por %p115, %p116
      %p118 = scmp.ne.s32.totalorder %s107, %s110
      %p119 = scmp.eq.s32.totalorder %s21, 1
      %p120 = por %p118, %p119
      %p121 = scmp.ne.s32.totalorder %s110, %s111
      %p122 = scmp.eq.s32.totalorder %s21, 0
      %p123 = por %p121, %p122
      %p124 = scmp.ne.s32.totalorder %s110, %s111
      %p125 = scmp.eq.s32.totalorder %s22, 1
      %p126 = por %p124, %p125
      %p128 = scmp.ne.s32.totalorder %s111, %s127
      %p129 = scmp.eq.s32.totalorder %s22, 0
      %p130 = por %p128, %p129
      %s131 = ssub.s32 %s23, %s42
      %s132 = ssub.s32 %s24, %s38
      %s133 = sor.u32 %s131, %s132
      %p134 = scmp.eq.s32.totalorder %s133, 0
      %s136 = sadd.s32 %s135, 1
      %s137 = scalar_select %p134, %s135, %s136
      %p140 = pneg %p134
      %p141 = scmp.eq.s32.totalorder %s16, 1
      %p142 = por %p140, %p141
      %p143 = scmp.ne.s32.totalorder %s135, %s138
      %p144 = scmp.eq.s32.totalorder %s16, 0
      %p145 = por %p143, %p144
      %p146 = scmp.ne.s32.totalorder %s135, %s138
      %p147 = scmp.eq.s32.totalorder %s21, 1
      %p148 = por %p146, %p147
      %p149 = scmp.ne.s32.totalorder %s138, %s139
      %p150 = scmp.eq.s32.totalorder %s21, 0
      %p151 = por %p149, %p150
      %p152 = scmp.ne.s32.totalorder %s138, %s139
      %p153 = scmp.eq.s32.totalorder %s22, 1
      %p154 = por %p152, %p153
      %p156 = scmp.ne.s32.totalorder %s139, %s155
      %p157 = scmp.eq.s32.totalorder %s22, 0
      %p158 = por %p156, %p157
      %p159 = scmp.le.s32.totalorder 1, %s16
      %p160 = scmp.lt.s32.totalorder %s16, 3
      %p161 = pnand %p159, %p160
      %p162 = pneg %p161
      // Predicated region
      $region9: #{tpu_custom_call.1} parent=5 // pred_check
        _
      $region10: #{tpu_custom_call.1} parent=5 // pred_check_branch
        %164 = sbr.rel (%p161) target = $region12
      $region11: #{tpu_custom_call.1} parent=5 // pred_region
        %s165 = ssub.s32 %s16, 1
      $region12: #{tpu_custom_call.1} parent=5 // pred_fallthru
        _
      %p166 = scmp.lt.s32.totalorder %s16, 2
      // Predicated region
      $region13: #{tpu_custom_call.1} parent=5 // pred_check
        %p167 = pneg %p166
      $region14: #{tpu_custom_call.1} parent=5 // pred_check_branch
        %169 = sbr.rel (%p167) target = $region16
      $region15: #{tpu_custom_call.1} parent=5 // pred_region
        // Predicated region
        $region17: #{tpu_custom_call.1} parent=15 // pred_check
          %p170 = pneg %p59
        $region18: #{tpu_custom_call.1} parent=15 // pred_check_branch
          %172 = sbr.rel (%p170) target = $region20
        $region19: #{tpu_custom_call.1} parent=15 // pred_region
          %s173 = sand.u32 %s49, 1
          %s174 = scalar_lea.sflag [#allocation5], %s173
          %s175 = sand.u32 %s49, 1
          %s176 = smul.addr %s175, 8
          %s177 = scalar_lea.vmem [#allocation4], %s176
          %s178 = sadd.s32 %s24, %s25
          %s179 = smul.u32 2, %s178
          %181 = vsyncadd %s174, 0
          %s182 = smul.addr %s23, 2
          %s183 = sadd.s32 %s179, %s182
          %s184 = smul.addr %s183, 4
          %s185 = scalar_lea.hbm %s0, %s184
          %s187 = sshll.u32 %s185, 4
          %s188 = int_to_ptr.hbm [resolvable:$true] %s187
          %s189 = sshll.u32 %s177, 4
          %s190 = int_to_ptr.vmem [resolvable:$true] %s189
          %192 = dma.hbm_to_vmem [thread:$0]  %s188, 128, %s190, %s174
        $region20: #{tpu_custom_call.1} parent=15 // pred_fallthru
          _
        // Predicated region
        $region21: #{tpu_custom_call.1} parent=15 // pred_check
          %p193 = pneg %p89
        $region22: #{tpu_custom_call.1} parent=15 // pred_check_branch
          %195 = sbr.rel (%p193) target = $region24
        $region23: #{tpu_custom_call.1} parent=15 // pred_region
          %s196 = sand.u32 %s79, 1
          %s197 = scalar_lea.sflag [#allocation7], %s196
          %s198 = sand.u32 %s79, 1
          %s199 = smul.addr %s198, 2
          %s200 = scalar_lea.vmem [#allocation6], %s199
          %s201 = sadd.s32 %s24, %s25
          %s202 = smul.u32 2, %s201
          %204 = vsyncadd %s197, 0
          %s205 = smul.addr %s23, 2
          %s206 = sadd.s32 %s202, %s205
          %s207 = scalar_lea.hbm %s1, %s206
          %s209 = sshll.u32 %s207, 4
          %s210 = int_to_ptr.hbm [resolvable:$true] %s209
          %s211 = sshll.u32 %s200, 4
          %s212 = int_to_ptr.vmem [resolvable:$true] %s211
          %214 = dma.hbm_to_vmem [thread:$0]  %s210, 32, %s212, %s197
        $region24: #{tpu_custom_call.1} parent=15 // pred_fallthru
          _
      $region16: #{tpu_custom_call.1} parent=5 // pred_fallthru
        _
      %p215 = scmp.le.s32.totalorder 1, %s16
      %p216 = scmp.lt.s32.totalorder %s16, 3
      %p217 = pnand %p215, %p216
      %p218 = pneg %p217
      // Predicated region
      $region25: #{tpu_custom_call.1} parent=5 // pred_check
        _
      $region26: #{tpu_custom_call.1} parent=5 // pred_check_branch
        %220 = sbr.rel (%p217) target = $region28
      $region27: #{tpu_custom_call.1} parent=5 // pred_region
        %s221 = ssub.s32 %s16, 1
        %s222 = sand.u32 %s52, 1
        %s223 = scalar_lea.sflag [#allocation5], %s222
        %s224 = sand.u32 %s52, 1
        %s225 = smul.addr %s224, 8
        %s226 = scalar_lea.vmem [#allocation4], %s225
        // Predicated region
        $region29: #{tpu_custom_call.1} parent=27 // pred_check
          %p227 = pneg %p65
        $region30: #{tpu_custom_call.1} parent=27 // pred_check_branch
          %229 = sbr.rel (%p227) target = $region32
        $region31: #{tpu_custom_call.1} parent=27 // pred_region
          %231 = dma.done %s223, 128
        $region32: #{tpu_custom_call.1} parent=27 // pred_fallthru
          _
        %s232 = sand.u32 %s82, 1
        %s233 = scalar_lea.sflag [#allocation7], %s232
        %s234 = sand.u32 %s82, 1
        %s235 = smul.addr %s234, 2
        %s236 = scalar_lea.vmem [#allocation6], %s235
        // Predicated region
        $region33: #{tpu_custom_call.1} parent=27 // pred_check
          %p237 = pneg %p95
        $region34: #{tpu_custom_call.1} parent=27 // pred_check_branch
          %239 = sbr.rel (%p237) target = $region36
        $region35: #{tpu_custom_call.1} parent=27 // pred_region
          %241 = dma.done %s233, 32
        $region36: #{tpu_custom_call.1} parent=27 // pred_fallthru
          _
        %s242 = sand.u32 %s52, 1
        %s243 = scalar_lea.sflag [#allocation5], %s242
        %s244 = sand.u32 %s52, 1
        %s245 = smul.addr %s244, 8
        %s246 = scalar_lea.vmem [#allocation4], %s245
        %p247 = pneg %p65
        %p248 = pneg %p62
        %s249 = sand.u32 %s82, 1
        %s250 = scalar_lea.sflag [#allocation7], %s249
        %s251 = sand.u32 %s82, 1
        %s252 = smul.addr %s251, 2
        %s253 = scalar_lea.vmem [#allocation6], %s252
        %p254 = pneg %p95
        %p255 = pneg %p92
        %p256 = pneg %p123
        %p257 = pneg %p120
        %p258 = scmp.lt.s32.totalorder %s26, 1
        %s259 = scalar_select %p258, %s26, 1
        %p260 = scmp.lt.s32.totalorder %s27, 0
        %s261 = scalar_select %p260, %s27, 0
        %s262 = sadd.s32 %s261, %s259
        %s263 = smul.addr %s262, 4
        %s264 = scalar_lea.vmem %s2, %s263
        %p265 = pneg %p151
        %p266 = pneg %p148
        %p267 = scmp.lt.s32.totalorder %s26, 1
        %s268 = scalar_select %p267, %s26, 1
        %p269 = scmp.lt.s32.totalorder %s27, 0
        %s270 = scalar_select %p269, %s27, 0
        %s271 = sadd.s32 %s270, %s268
        %s272 = smul.addr %s271, 4
        %s273 = scalar_lea.vmem %s3, %s272
        %s274 = sadd.s32 %s27, %s28
        %s275 = smul.u32 2, %s274
        %s276 = sadd.s32 %s27, %s28
        %s277 = smul.u32 2, %s276
        %p278 = scmp.lt.s32.totalorder %s26, 1
        %s279 = scalar_select %p278, %s26, 1
        %p280 = scmp.lt.s32.totalorder %s27, 0
        %s281 = scalar_select %p280, %s27, 0
        %s282 = sadd.s32 %s281, %s279
        %s283 = smul.addr %s282, 4
        %s284 = scalar_lea.vmem %s2, %s283
        %p285 = scmp.lt.s32.totalorder %s26, 1
        %s286 = scalar_select %p285, %s26, 1
        %p287 = scmp.lt.s32.totalorder %s27, 0
        %s288 = scalar_select %p287, %s27, 0
        %s289 = sadd.s32 %s288, %s286
        %s290 = smul.addr %s289, 4
        %s291 = scalar_lea.vmem %s3, %s290
        %p292 = scmp.eq.s32.totalorder %s28, 0
        // Predicated region
        $region37: #{tpu_custom_call.1} parent=27 // pred_check
          %p293 = pneg %p292
        $region38: #{tpu_custom_call.1} parent=27 // pred_check_branch
          %295 = sbr.rel (%p293) target = $region40
        $region39: #{tpu_custom_call.1} parent=27 // pred_region
          %296 = vst [vmem:[#allocation2] sm:$0xff] 0.0
          %297 = vst [vmem:[#allocation3] sm:$0xff] 0.0
        $region40: #{tpu_custom_call.1} parent=27 // pred_fallthru
          _
        %v298 = vld [vmem:[%s226] sm:$0xff]
        %v299 = vld [vmem:[%s236] sm:$0x3]
        %301 = vst [vmem:[#allocation1] ss:$2 sm:$0xff] %v298
        %v302 = vld.sshfl [vmem:[#allocation1] sm:$0xff pattern:$0x75316420]
        %v303 = vld.sshfl [vmem:[#allocation1 + $0x8] sm:$0xff pattern:$0x75316420]
        %vm306 = vcmask 1043456
        %v307 = vsel %vm306, %v302, -inf
        %v308 = vrot.slane %v307, 4
        %v309 = vmax.f32 %v307, %v308
        %v310 = vrot.slane %v309, 2
        %v311 = vmax.f32 %v309, %v310
        %v312 = vrot.slane %v311, 1
        %v313 = vmax.f32 %v311, %v312
        %v314 = vsel %vm306, %v303, -inf
        %v315 = vrot.slane %v314, 4
        %v316 = vmax.f32 %v314, %v315
        %v317 = vrot.slane %v316, 2
        %v318 = vmax.f32 %v316, %v317
        %v319 = vrot.slane %v318, 1
        %v320 = vmax.f32 %v318, %v319
        %v323 = vrot.slane %v320, 4
        %v324 = vsel %vm306, %v313, %v323
        %v326 = vsub.f32 %v298, %v324
        %v327 = vmul.f32 %v326, 1.442695
        %v328 = vpow.pop %v327
        %330 = vst [vmem:[#allocation1] ss:$2 sm:$0xff] %v328
        %v331 = vld.sshfl [vmem:[#allocation1] sm:$0xff pattern:$0x75316420]
        %v332 = vld.sshfl [vmem:[#allocation1 + $0x8] sm:$0xff pattern:$0x75316420]
        %v335 = vsel %vm306, %v331, 0.0
        %v336 = vrot.slane %v335, 4
        %v337 = vadd.f32 %v335, %v336
        %v338 = vrot.slane %v337, 2
        %v339 = vadd.f32 %v337, %v338
        %v340 = vrot.slane %v339, 1
        %v341 = vadd.f32 %v339, %v340
        %v342 = vsel %vm306, %v332, 0.0
        %v343 = vrot.slane %v342, 4
        %v344 = vadd.f32 %v342, %v343
        %v345 = vrot.slane %v344, 2
        %v346 = vadd.f32 %v344, %v345
        %v347 = vrot.slane %v346, 1
        %v348 = vadd.f32 %v346, %v347
        %v349 = vlog2.pop %v341
        %v350 = vmul.f32 %v349, 0.6931472
        %v351 = vlog2.pop %v348
        %v352 = vmul.f32 %v351, 0.6931472
        %v353 = vlaneseq
        %v354 = vshrl.u32 %v353, 7
        %v355 = vperm.slane %v299, 0
        %v356 = vperm.slane %v299, 1
        %vm357 = vcmp.eq.s32.totalorder %v354, %v355
        %vm358 = vcmp.eq.s32.totalorder %v354, %v356
        %vm359 = vcmp.ne.s32.totalorder %v299, 255
        %v360 = vsel %vm359, 1, 0
        %v361 = vperm.slane %v360, 0
        %v362 = vperm.slane %v360, 1
        %vm363 = vcmp.eq.s32.totalorder %v361, 1
        %vm364 = vcmp.eq.s32.totalorder %v362, 1
        %vm365 = vmand %vm357, %vm363
        %vm366 = vmand %vm358, %vm364
        %v367 = vld [vmem:[#allocation2] sm:$0xff]
        %369 = vst [vmem:[#allocation1] ss:$2 sm:$0xff] %v326
        %v370 = vld.sshfl [vmem:[#allocation1] sm:$0xff pattern:$0x75316420]
        %v371 = vld.sshfl [vmem:[#allocation1 + $0x8] sm:$0xff pattern:$0x75316420]
        %v374 = vsub.f32 %v350, %v370
        %v375 = vsub.f32 %v352, %v371
        %v376 = vsel %vm365, %v374, 0.0
        %v377 = vsel %vm366, %v375, 0.0
        %v380 = vrot.slane %v377, 4
        %v381 = vsel %vm306, %v376, %v380
        %v383 = vadd.f32 %v367, %v381
        %384 = vst [vmem:[#allocation2] sm:$0xff] %v383
        %v385 = vld [vmem:[#allocation3] sm:$0xff]
        %v386 = vsel %vm365, 1, 0
        %v387 = vsel %vm366, 1, 0
        %v388 = vcvt.s32.f32 %v386
        %v389 = vcvt.s32.f32 %v387
        %v392 = vrot.slane %v389, 4
        %v393 = vsel %vm306, %v388, %v392
        %v395 = vadd.f32 %v385, %v393
        %396 = vst [vmem:[#allocation3] sm:$0xff] %v395
        // Predicated region
        $region41: #{tpu_custom_call.1} parent=27 // pred_check
          %p397 = pneg %p292
        $region42: #{tpu_custom_call.1} parent=27 // pred_check_branch
          %399 = sbr.rel (%p397) target = $region44
        $region43: #{tpu_custom_call.1} parent=27 // pred_region
          %v400 = vld [vmem:[#allocation2] sm:$0xff]
          %402 = vst [vmem:[#allocation1] ss:$2 sm:$0xff] %v400
          %v403 = vld.sshfl [vmem:[#allocation1] sm:$0xff pattern:$0x75316420]
          %v404 = vld.sshfl [vmem:[#allocation1 + $0x8] sm:$0xff pattern:$0x75316420]
          %v407 = vsel %vm306, %v403, 0.0
          %v408 = vsel %vm306, %v404, 0.0
          %v409 = vadd.f32 %v407, %v408
          %410 = vadd.xlane.f32.xlu0 %v409
          %v411 = vpop.xlane.xlu0 %410
          %vm412 = vcmask 3072
          %413 = vst.msk [vmem:[%s284] sm:$0xf] %vm412, %v411
          %v414 = vld [vmem:[#allocation3] sm:$0xff]
          %416 = vst [vmem:[#allocation1] ss:$2 sm:$0xff] %v414
          %v417 = vld.sshfl [vmem:[#allocation1] sm:$0xff pattern:$0x75316420]
          %v418 = vld.sshfl [vmem:[#allocation1 + $0x8] sm:$0xff pattern:$0x75316420]
          %v421 = vsel %vm306, %v417, 0.0
          %v422 = vsel %vm306, %v418, 0.0
          %v423 = vadd.f32 %v421, %v422
          %424 = vadd.xlane.f32.xlu0 %v423
          %v425 = vpop.xlane.xlu0 %424
          %426 = vst.msk [vmem:[%s291] sm:$0xf] %vm412, %v425
        $region44: #{tpu_custom_call.1} parent=27 // pred_fallthru
          _
        %p427 = scmp.lt.s32.totalorder %s26, 1
        %s428 = scalar_select %p427, %s26, 1
        %p429 = scmp.lt.s32.totalorder %s27, 0
        %s430 = scalar_select %p429, %s27, 0
        %s431 = sadd.s32 %s430, %s428
        %s432 = smul.addr %s431, 4
        %s433 = scalar_lea.vmem %s2, %s432
        %p434 = scmp.lt.s32.totalorder %s26, 1
        %s435 = scalar_select %p434, %s26, 1
        %p436 = scmp.lt.s32.totalorder %s27, 0
        %s437 = scalar_select %p436, %s27, 0
        %s438 = sadd.s32 %s437, %s435
        %s439 = smul.addr %s438, 4
        %s440 = scalar_lea.vmem %s3, %s439
        // Predicated region
        $region45: #{tpu_custom_call.1} parent=27 // pred_check
          %p441 = pneg %p120
        $region46: #{tpu_custom_call.1} parent=27 // pred_check_branch
          %443 = sbr.rel (%p441) target = $region48
        $region47: #{tpu_custom_call.1} parent=27 // pred_region
          _
        $region48: #{tpu_custom_call.1} parent=27 // pred_fallthru
          _
        // Predicated region
        $region49: #{tpu_custom_call.1} parent=27 // pred_check
          %p444 = pneg %p148
        $region50: #{tpu_custom_call.1} parent=27 // pred_check_branch
          %446 = sbr.rel (%p444) target = $region52
        $region51: #{tpu_custom_call.1} parent=27 // pred_region
          _
        $region52: #{tpu_custom_call.1} parent=27 // pred_fallthru
          _
      $region28: #{tpu_custom_call.1} parent=5 // pred_fallthru
        _
      %p447 = scmp.le.s32.totalorder 2, %s16
      // Predicated region
      $region53: #{tpu_custom_call.1} parent=5 // pred_check
        %p448 = pneg %p447
      $region54: #{tpu_custom_call.1} parent=5 // pred_check_branch
        %450 = sbr.rel (%p448) target = $region56
      $region55: #{tpu_custom_call.1} parent=5 // pred_region
        %s451 = ssub.s32 %s16, 2
        // Predicated region
        $region57: #{tpu_custom_call.1} parent=55 // pred_check
          %p452 = pneg %p126
        $region58: #{tpu_custom_call.1} parent=55 // pred_check_branch
          %454 = sbr.rel (%p452) target = $region60
        $region59: #{tpu_custom_call.1} parent=55 // pred_region
          %p455 = scmp.lt.s32.totalorder %s29, 1
          %s456 = scalar_select %p455, %s29, 1
          %p457 = scmp.lt.s32.totalorder %s30, 0
          %s458 = scalar_select %p457, %s30, 0
          %s459 = sadd.s32 %s458, %s456
          %s460 = smul.addr %s459, 4
          %s461 = scalar_lea.vmem %s2, %s460
        $region60: #{tpu_custom_call.1} parent=55 // pred_fallthru
          _
        // Predicated region
        $region61: #{tpu_custom_call.1} parent=55 // pred_check
          %p462 = pneg %p154
        $region62: #{tpu_custom_call.1} parent=55 // pred_check_branch
          %464 = sbr.rel (%p462) target = $region64
        $region63: #{tpu_custom_call.1} parent=55 // pred_region
          %p465 = scmp.lt.s32.totalorder %s29, 1
          %s466 = scalar_select %p465, %s29, 1
          %p467 = scmp.lt.s32.totalorder %s30, 0
          %s468 = scalar_select %p467, %s30, 0
          %s469 = sadd.s32 %s468, %s466
          %s470 = smul.addr %s469, 4
          %s471 = scalar_lea.vmem %s3, %s470
        $region64: #{tpu_custom_call.1} parent=55 // pred_fallthru
          _
      $region56: #{tpu_custom_call.1} parent=5 // pred_fallthru
        _
    $region6: #{tpu_custom_call.1} parent=1 // loop_footer
      %s20 = sadd.s32 1, %s16
    $region7: #{tpu_custom_call.1} parent=1 // loop_footer_branch
      %15 = sbr.rel target = $region3
    $region8: #{tpu_custom_call.1} parent=1 // loop_exit
      _
    %472 = vsyncpa [#allocation5], 1
    %s473 = scalar_lea.sflag [#allocation5], 1
    %474 = vsyncpa %s473, 1
    %475 = vsyncpa [#allocation7], 1
    %s476 = scalar_lea.sflag [#allocation7], 1
    %477 = vsyncpa %s476, 1

</llo_original>
